<compile_context>
chip_gen: v7x
topology: tpu7x:2x2x1
jax: 0.10.0
libtpu: 0.0.40
codegen_flags: <defaults>
</compile_context>

<pallas_src>
import jax
import jax.numpy as jnp
from jax.experimental import pallas as pl
from jax.experimental.pallas import tpu as pltpu

C = 10                                  # scale length, from nn.Parameter(torch.rand(10))
LANE_WIDTH = 640                        # lcm(10, 128): lane-dense row width
ROWS_PER_WIDE = LANE_WIDTH // C         # 64 logical length-10 rows per 640-wide row

MAX_FAST_TILE_ROWS = 2048               # (2048, 640) f32 ~= 5 MiB/buffer
VMEM_LIMIT_BYTES = 48 * 1024 * 1024     # safe on v5e/v6e (128 MiB phys) and v7x (64 MiB phys)


def _scale_kernel(x_ref, s_ref, o_ref):
    # x_ref: (tile_rows, W) input tile in its NATIVE dtype (bf16 stays bf16 in HBM/VMEM);
    # s_ref: (1, W) scale row, already in the promoted dtype, resident in VMEM;
    # o_ref: (tile_rows, W) output tile in the promoted dtype.
    # jnp promotion performs the (e.g. bf16 -> f32) cast on-chip, fused with the multiply.
    o_ref[...] = (x_ref[...] * s_ref[...]).astype(o_ref.dtype)


def _scale_2d(x2d: jax.Array, s_row: jax.Array, tile_rows: int, out_dtype) -> jax.Array:
    """Broadcast-multiply a (M, W) slab by a (1, W) row using (tile_rows, W) blocks."""
    M, W = x2d.shape
    grid = (pl.cdiv(M, tile_rows),)
    return pl.pallas_call(
        _scale_kernel,
        out_shape=jax.ShapeDtypeStruct((M, W), out_dtype),
        grid_spec=pltpu.PrefetchScalarGridSpec(
            num_scalar_prefetch=0,
            grid=grid,
            in_specs=[
                pl.BlockSpec((tile_rows, W), lambda i: (i, 0)),     # input row tile
                pl.BlockSpec(memory_space=pltpu.MemorySpace.VMEM),  # scale row: fetched once
            ],
            out_specs=pl.BlockSpec((tile_rows, W), lambda i: (i, 0)),
        ),
        compiler_params=pltpu.CompilerParams(
            dimension_semantics=("parallel",),       # v7x: 2 TensorCores split the row steps
            vmem_limit_bytes=VMEM_LIMIT_BYTES,
        ),
    )(x2d, s_row)


def _pick_fast_tile_rows(wide_rows: int) -> int:
    """Row-tile size for the (wide_rows, 640) fast path.

    Guarantees: multiple of 8 sublanes (or equal to the full dim when tiny), at most
    MAX_FAST_TILE_ROWS, and — whenever there is enough work — an even number of
    balanced grid steps so both v7x TensorCores stay busy.
    """
    if wide_rows <= 8:
        return wide_rows                               # single full-extent block
    n_steps = max(2, pl.cdiv(wide_rows, MAX_FAST_TILE_ROWS))
    n_steps = 2 * pl.cdiv(n_steps, 2)                  # even step count for 2 TCs
    tile = pl.cdiv(wide_rows, n_steps)
    tile = pl.cdiv(tile, 8) * 8                        # sublane-aligned
    return min(tile, MAX_FAST_TILE_ROWS)


def scale_forward(x: jax.Array, scale: jax.Array) -> jax.Array:
    """Compute x * scale, broadcasting scale (shape (10,)) over the last dim of x."""
    assert x.shape[-1] == scale.shape[0], "last dim of input must match scale length"
    orig_shape = x.shape

    # PyTorch type promotion (bf16 * f32 -> f32). Only the tiny scale is converted in
    # the wrapper; the input's promotion is fused into the kernel.
    out_dtype = jnp.result_type(x.dtype, scale.dtype)
    scale = scale.astype(out_dtype)

    total = x.size
    if total == 0:
        return jnp.zeros(orig_shape, out_dtype)

    n_rows = total // C                       # number of logical length-10 rows
    x_flat = x.reshape(-1)                    # contiguous reshape: no data movement

    prefix_rows = (n_rows // ROWS_PER_WIDE) * ROWS_PER_WIDE
    rem_rows = n_rows - prefix_rows

    if rem_rows == 0:
        # ---- pure lane-dense path (no slicing, no concat) ---------------------
        wide_rows = n_rows // ROWS_PER_WIDE
        x_fast = x_flat.reshape(wide_rows, LANE_WIDTH)
        s_wide = jnp.tile(scale, ROWS_PER_WIDE).reshape(1, LANE_WIDTH)
        out_flat = _scale_2d(x_fast, s_wide, _pick_fast_tile_rows(wide_rows),
                             out_dtype).reshape(-1)
    else:
        # ---- lane-dense prefix + tiny (<640-element) remainder kernel ---------
        parts = []
        if prefix_rows > 0:
            wide_rows = prefix_rows // ROWS_PER_WIDE
            x_fast = x_flat[: prefix_rows * C].reshape(wide_rows, LANE_WIDTH)
            s_wide = jnp.tile(scale, ROWS_PER_WIDE).reshape(1, LANE_WIDTH)
            parts.append(_scale_2d(x_fast, s_wide, _pick_fast_tile_rows(wide_rows),
                                   out_dtype).reshape(-1))
        x_rem = x_flat[prefix_rows * C:].reshape(rem_rows, C)
        s_row = scale.reshape(1, C)
        parts.append(_scale_2d(x_rem, s_row, rem_rows, out_dtype).reshape(-1))
        out_flat = parts[0] if len(parts) == 1 else jnp.concatenate(parts)

    return out_flat.reshape(orig_shape)


if __name__ == "__main__":
    key = jax.random.PRNGKey(0)
    k_scale, k1, k2, k3 = jax.random.split(key, 4)

    # Deterministic "parameter" init mirroring torch.rand(10): uniform [0, 1).
    scale = jax.random.uniform(k_scale, (C,), dtype=jnp.float32)

    # Lane-dense fast path (8*16 = 128 rows, multiple of 64).
    x_fast = jax.random.normal(k1, (8, 16, C), dtype=jnp.float32)
    out_fast = jax.block_until_ready(scale_forward(x_fast, scale))
    assert out_fast.shape == x_fast.shape and out_fast.dtype == jnp.float32
    assert jnp.allclose(out_fast, x_fast * scale, atol=1e-6, rtol=1e-6), "fast path mismatch"

    # Fused bf16 -> f32 promotion (input stays bf16 into the kernel).
    x_bf16 = jax.random.normal(k2, (8, 16, C), dtype=jnp.bfloat16)
    out_bf = jax.block_until_ready(scale_forward(x_bf16, scale))
    assert out_bf.dtype == jnp.float32
    assert jnp.allclose(out_bf, x_bf16.astype(jnp.float32) * scale,
                        atol=1e-5, rtol=1e-5), "fused-promotion mismatch"

    # Prefix + remainder split: 13*10 = 130 rows -> 128 lane-dense + 2 remainder rows.
    x_mix = jax.random.normal(k3, (13, 10, C), dtype=jnp.float32)
    out_mix = jax.block_until_ready(scale_forward(x_mix, scale))
    assert jnp.allclose(out_mix, x_mix * scale, atol=1e-6, rtol=1e-6), "prefix+remainder mismatch"

    # Tiny odd shape (remainder-only kernel).
    x_small = jax.random.normal(k1, (2, 3, C), dtype=jnp.float32)
    out_small = jax.block_until_ready(scale_forward(x_small, scale))
    assert jnp.allclose(out_small, x_small * scale, atol=1e-6, rtol=1e-6), "remainder-only mismatch"

    print("KERNEL_OK")
</pallas_src>

<mosaic_0001>
module attributes {stable_mosaic.version = 11 : i64} {
  func.func @_scale_kernel(%arg0: i32, %arg1: memref<2x640xf32, #tpu.memory_space<vmem>>, %arg2: memref<1x640xf32, #tpu.memory_space<vmem>>, %arg3: memref<2x640xf32, #tpu.memory_space<vmem>>) attributes {dimension_semantics = [#tpu.dimension_semantics<parallel>], iteration_bounds = array<i64: 1>, scalar_prefetch = 0 : i64, scratch_operands = 0 : i64, tpu.core_type = #tpu.core_type<tc>, window_params = [{transform_indices = @transform_0, window_bounds = array<i64: 2, 640>}, {pipeline_mode = #tpu.pipeline_mode<synchronous>, transform_indices = @transform_1, window_bounds = array<i64: 1, 640>}, {transform_indices = @transform_2, window_bounds = array<i64: 2, 640>}]} {
    %c0 = arith.constant 0 : index
    %c0_0 = arith.constant 0 : index
    %0 = vector.load %arg1[%c0, %c0_0] : memref<2x640xf32, #tpu.memory_space<vmem>>, vector<2x640xf32>
    %c0_1 = arith.constant 0 : index
    %c0_2 = arith.constant 0 : index
    %1 = vector.load %arg2[%c0_1, %c0_2] : memref<1x640xf32, #tpu.memory_space<vmem>>, vector<1x640xf32>
    %2 = vector.broadcast %1 : vector<1x640xf32> to vector<2x640xf32>
    %3 = arith.mulf %0, %2 : vector<2x640xf32>
    %c0_3 = arith.constant 0 : index
    %c0_4 = arith.constant 0 : index
    %4 = vector.load %arg3[%c0_3, %c0_4] : memref<2x640xf32, #tpu.memory_space<vmem>>, vector<2x640xf32>
    tpu.vector_store %arg3[%c0_3, %c0_4], %3 {strides = array<i32>} : memref<2x640xf32, #tpu.memory_space<vmem>>, vector<2x640xf32>,
    return
  }
  func.func @transform_0(%arg0: i32) -> (i32, i32) {
    %c0_i32 = arith.constant 0 : i32
    %c0_i32_0 = arith.constant 0 : i32
    return %arg0, %c0_i32 : i32, i32
  }
  func.func @transform_1(%arg0: i32) -> (i32, i32) {
    %c0_i32 = arith.constant 0 : i32
    %c0_i32_0 = arith.constant 0 : i32
    %c0_i32_1 = arith.constant 0 : i32
    return %c0_i32, %c0_i32_0 : i32, i32
  }
  func.func @transform_2(%arg0: i32) -> (i32, i32) {
    %c0_i32 = arith.constant 0 : i32
    %c0_i32_0 = arith.constant 0 : i32
    return %arg0, %c0_i32 : i32, i32
  }
}

</mosaic_0001>

<llo_original>
// kernel: tpu_custom_call.1
$region0: #{tpu_custom_call.1}
  #allocation0 [shape = 'u32[]', space=smem, size = 0x4, offset = 0x4, fixed_abs, tag = 'smem constant byte address 0x4 - core index']
  #allocation1 [shape = 'u32[144,128]{1,0:T(1,128)}', space=vmem, size = 0x12000, scoped, tag = 'internal scratch']
  %s0 = inlined_call_operand.hbm [shape: f32[2,640], index: 0, kind: input, shape index: {}]
  %s1 = inlined_call_operand.hbm [shape: f32[1,640], index: 1, kind: input, shape index: {}]
  %s2 = inlined_call_operand.hbm [shape: f32[2,640], index: 2, kind: output, shape index: {}]
  %s3 = sld [smem:[#allocation0]]
  $region26: #{tpu_custom_call.1} parent=0
    _
  %s5 = ssub.s32 1, %s3
  %s6 = scalar_select 0, %s5, %s3
  $region1: #{tpu_custom_call.1} parent=0
    #allocation2 [shape = 'u8[5120]{0}', space=vmem, size = 0x1400, scoped, tag = 'input window, operand 0, single buffered']
    #allocation3 [shape = 's32[1]{0}', space=sflag, size = 0x4, scoped, tag = 'scoped memory for tpu_custom_call.1']
    #allocation4 [shape = 's32[1]{0}', space=sflag, size = 0x4, scoped, tag = 'scoped memory for tpu_custom_call.1']
    #allocation5 [shape = 'u8[2560]{0}', space=vmem, size = 0xc00, scoped, tag = 'input window, operand 1, single buffered']
    #allocation6 [shape = 's32[1]{0}', space=sflag, size = 0x4, scoped, tag = 'scoped memory for tpu_custom_call.1']
    #allocation7 [shape = 'u8[5120]{0}', space=vmem, size = 0x1400, scoped, tag = 'output window, operand 0, single buffered']
    %7 = vsyncpa [#allocation3], 0
    %8 = vsyncpa [#allocation6], 0
    %9 = vsyncpa [#allocation4], 0
    // Predicated region
    $region2: #{tpu_custom_call.1} parent=1 // pred_check
      _
    $region3: #{tpu_custom_call.1} parent=1 // pred_check_branch
      %11 = sbr.rel (0) target = $region5
    $region4: #{tpu_custom_call.1} parent=1 // pred_region
      %s13 = ssub.s32 160, 160
      %14 = vsyncadd [#allocation3], %s13
      %s16 = sshll.u32 [#allocation2], 4
      %s17 = int_to_ptr.vmem [resolvable:$true] %s16
      %19 = dma.hbm_to_vmem [thread:$0]  %s0, 160, %s17, [#allocation3]
    $region5: #{tpu_custom_call.1} parent=1 // pred_fallthru
      _
    // Predicated region
    $region6: #{tpu_custom_call.1} parent=1 // pred_check
      _
    $region7: #{tpu_custom_call.1} parent=1 // pred_check_branch
      %21 = sbr.rel (0) target = $region9
    $region8: #{tpu_custom_call.1} parent=1 // pred_region
      %s23 = ssub.s32 80, 80
      %24 = vsyncadd [#allocation6], %s23
      %s26 = sshll.u32 [#allocation5], 4
      %s27 = int_to_ptr.vmem [resolvable:$true] %s26
      %29 = dma.hbm_to_vmem [thread:$0]  %s1, 80, %s27, [#allocation6]
    $region9: #{tpu_custom_call.1} parent=1 // pred_fallthru
      _
    // Predicated region
    $region10: #{tpu_custom_call.1} parent=1 // pred_check
      _
    $region11: #{tpu_custom_call.1} parent=1 // pred_check_branch
      %31 = sbr.rel (0) target = $region13
    $region12: #{tpu_custom_call.1} parent=1 // pred_region
      %32 = dma.done [#allocation3], 160
    $region13: #{tpu_custom_call.1} parent=1 // pred_fallthru
      _
    // Predicated region
    $region14: #{tpu_custom_call.1} parent=1 // pred_check
      _
    $region15: #{tpu_custom_call.1} parent=1 // pred_check_branch
      %34 = sbr.rel (0) target = $region17
    $region16: #{tpu_custom_call.1} parent=1 // pred_region
      %35 = dma.done [#allocation6], 80
    $region17: #{tpu_custom_call.1} parent=1 // pred_fallthru
      _
    %v36 = vld [vmem:[#allocation2] sm:$0xff]
    %v37 = vld [vmem:[#allocation2 + $0x8] sm:$0x3]
    %v38 = vld [vmem:[#allocation5] sm:$0x1f]
    %v40 = vlaneseq
    %v41 = vshrl.u32 %v40, 7
    %v42 = vsub.s32 0, %v41
    %v43 = vrot.slane %v38, %v42
    %v44 = vlaneseq
    %v45 = vshrl.u32 %v44, 7
    %v46 = vsub.s32 1, %v45
    %v47 = vrot.slane %v38, %v46
    %v48 = vlaneseq
    %v49 = vshrl.u32 %v48, 7
    %v50 = vsub.s32 2, %v49
    %v51 = vrot.slane %v38, %v50
    %v52 = vlaneseq
    %v53 = vshrl.u32 %v52, 7
    %v54 = vsub.s32 3, %v53
    %v55 = vrot.slane %v38, %v54
    %v56 = vlaneseq
    %v57 = vshrl.u32 %v56, 7
    %v58 = vsub.s32 4, %v57
    %v59 = vrot.slane %v38, %v58
    %v60 = vcombine.low %v43, %v47
    %v61 = vcombine.low %v51, %v55
    %v63 = vunpack.c.l.s4 1983009808
    %v64 = vunpack.c.0.s8 %v63
    %v65 = vlaneseq
    %v66 = vshrl.u32 %v65, 7
    %v67 = vsub.s32 %v64, %v66
    %v68 = vrot.slane %v60, %v67
    %v70 = vunpack.c.l.s4 1983009808
    %v71 = vunpack.c.0.s8 %v70
    %v72 = vlaneseq
    %v73 = vshrl.u32 %v72, 7
    %v74 = vsub.s32 %v71, %v73
    %v75 = vrot.slane %v61, %v74
    %v76 = vcombine.low %v68, %v75
    %v78 = vunpack.c.l.s4 1983009808
    %v79 = vunpack.c.0.s8 %v78
    %v80 = vlaneseq
    %v81 = vshrl.u32 %v80, 7
    %v82 = vsub.s32 %v79, %v81
    %v83 = vrot.slane %v59, %v82
    %v86 = vmul.f32 %v36, %v76
    %v87 = vmul.f32 %v37, %v83
    %88 = vst [vmem:[#allocation7] sm:$0xff] %v86
    %89 = vst [vmem:[#allocation7 + $0x8] sm:$0x3] %v87
    // Predicated region
    $region18: #{tpu_custom_call.1} parent=1 // pred_check
      _
    $region19: #{tpu_custom_call.1} parent=1 // pred_check_branch
      %91 = sbr.rel (0) target = $region21
    $region20: #{tpu_custom_call.1} parent=1 // pred_region
      %s93 = ssub.s32 160, 160
      %94 = vsyncadd [#allocation4], %s93
      %s96 = sshll.u32 [#allocation7], 4
      %s97 = int_to_ptr.vmem [resolvable:$true] %s96
      %99 = dma.vmem_to_hbm [thread:$0]  %s97, 160, %s2, [#allocation4]
    $region21: #{tpu_custom_call.1} parent=1 // pred_fallthru
      _
    // Predicated region
    $region22: #{tpu_custom_call.1} parent=1 // pred_check
      _
    $region23: #{tpu_custom_call.1} parent=1 // pred_check_branch
      %101 = sbr.rel (0) target = $region25
    $region24: #{tpu_custom_call.1} parent=1 // pred_region
      %102 = dma.done [#allocation4], 160
    $region25: #{tpu_custom_call.1} parent=1 // pred_fallthru
      _
    %103 = vsyncpa [#allocation3], 1
    %104 = vsyncpa [#allocation6], 1
    %105 = vsyncpa [#allocation4], 1

</llo_original>
